<compile_context>
chip_gen: v7x
topology: tpu7x:2x2x1
jax: 0.10.0
libtpu: 0.0.40
codegen_flags: <defaults>
</compile_context>

<pallas_src>
import jax
import jax.numpy as jnp
import numpy as np
from jax import lax
from jax.experimental import pallas as pl
from jax.experimental.pallas import tpu as pltpu


def saenet_kernel(x_ref, wn_ref, bn_ref, w_ref, be_ref, bd_ref,
                  rec_ref, feat_ref, act_ref,
                  act_sc, acc_sc):
    f = pl.program_id(1)
    n_f = pl.num_programs(1)

    # --- once per batch tile: frozen backbone projection + accumulator init ---
    @pl.when(f == 0)
    def _():
        act = jnp.tanh(
            jnp.dot(x_ref[...], wn_ref[...], preferred_element_type=jnp.float32)
            + bn_ref[...]
        )
        act_ref[...] = act                          # f32 output (matches module)
        act_sc[...] = act.astype(jnp.bfloat16)      # cached matmul operand
        acc_sc[...] = jnp.zeros_like(acc_sc)

    act_bf16 = act_sc[...]

    # --- SoftSAE encoder (tied weight): pre = act @ W_tile + be - 4 ---
    pre = (
        jnp.dot(act_bf16, w_ref[...], preferred_element_type=jnp.float32)
        + be_ref[...]
        - 4.0
    )
    # numerically-stable softplus: max(x, 0) + log1p(exp(-|x|))   (f32 / EUP)
    feat = jnp.maximum(pre, 0.0) + jnp.log1p(jnp.exp(-jnp.abs(pre)))
    feat_ref[...] = feat

    # --- SoftSAE decoder (same tied weight tile, contracting F vs F) ---
    acc_sc[...] += lax.dot_general(
        feat.astype(jnp.bfloat16), w_ref[...],
        dimension_numbers=(((1,), (1,)), ((), ())),
        preferred_element_type=jnp.float32,
    )

    # --- finalize reconstruction after the last feature tile ---
    @pl.when(f == n_f - 1)
    def _():
        rec_ref[...] = acc_sc[...] + bd_ref[...]


def _pad2(x, target_shape):
    pads = [(0, t - s) for s, t in zip(x.shape, target_shape)]
    if all(p == (0, 0) for p in pads):
        return x
    return jnp.pad(x, pads)


def saenet_forward(img, mask, params, *, tb=8, tf=512):
    """Full SAENet forward.  Returns dict matching the PyTorch module."""
    wn, bn, dec_w, be, bd = params
    B, C, H, W = img.shape
    D = dec_w.shape[0]          # network_output_dim
    F = dec_w.shape[1]          # n_features

    # Glue: masked global-average pool over spatial dims (synthetic backbone stem).
    m = mask[:, None, :, :].astype(img.dtype)               # (B,1,H,W)
    denom = jnp.maximum(jnp.sum(m, axis=(2, 3)), 1.0)       # (B,1)
    pooled = jnp.sum(img * m, axis=(2, 3)) / denom          # (B,C)

    # Tile sizes: lane-dense, (8,128)-aligned.
    tf = max(128, min(tf, F + (-F) % 128))
    Bp = B + (-B) % tb
    Cp = C + (-C) % 128
    Dp = D + (-D) % 128
    Fp = F + (-F) % tf

    pooled_p = _pad2(pooled, (Bp, Cp)).astype(jnp.bfloat16)   # (Bp, Cp)
    wn_p = _pad2(wn, (Cp, Dp)).astype(jnp.bfloat16)           # (Cp, Dp)
    bn_p = _pad2(bn, (1, Dp)).astype(jnp.float32)             # (1, Dp)
    w_p = _pad2(dec_w, (Dp, Fp)).astype(jnp.bfloat16)         # (Dp, Fp) tied weight
    be_p = _pad2(be, (1, Fp)).astype(jnp.float32)             # (1, Fp)
    bd_p = _pad2(bd, (1, Dp)).astype(jnp.float32)             # (1, Dp)

    n_b = Bp // tb
    n_f = Fp // tf

    # Advisory cost estimate for the XLA scheduler.
    flops = 2 * Bp * (Cp * Dp + 2 * Dp * Fp)
    transcendentals = Bp * (Dp + 2 * Fp)
    bytes_accessed = (
        2 * (Bp * Cp + Cp * Dp + n_b * Dp * Fp)      # bf16 inputs (weight per batch tile)
        + 4 * (Dp + Fp + Dp)                         # f32 biases
        + 4 * (Bp * Dp + Bp * Fp + Bp * Dp)          # f32 outputs
    )

    grid_spec = pltpu.PrefetchScalarGridSpec(
        num_scalar_prefetch=0,
        grid=(n_b, n_f),
        in_specs=[
            pl.BlockSpec((tb, Cp), lambda i, f: (i, 0)),   # pooled  (Bp, Cp)
            pl.BlockSpec((Cp, Dp), lambda i, f: (0, 0)),   # Wn      (Cp, Dp)
            pl.BlockSpec((1, Dp), lambda i, f: (0, 0)),    # bn      (1, Dp)
            pl.BlockSpec((Dp, tf), lambda i, f: (0, f)),   # tied W  -> F tile
            pl.BlockSpec((1, tf), lambda i, f: (0, f)),    # be      -> F tile
            pl.BlockSpec((1, Dp), lambda i, f: (0, 0)),    # bd      (1, Dp)
        ],
        out_specs=[
            pl.BlockSpec((tb, Dp), lambda i, f: (i, 0)),   # reconstructed (resident over f)
            pl.BlockSpec((tb, tf), lambda i, f: (i, f)),   # features
            pl.BlockSpec((tb, Dp), lambda i, f: (i, 0)),   # activations   (resident over f)
        ],
        scratch_shapes=[
            pltpu.VMEM((tb, Dp), jnp.bfloat16),  # cached backbone activations (matmul operand)
            pltpu.VMEM((tb, Dp), jnp.float32),   # reconstruction accumulator
        ],
    )

    rec, feat, act = pl.pallas_call(
        saenet_kernel,
        grid_spec=grid_spec,
        out_shape=[
            jax.ShapeDtypeStruct((Bp, Dp), jnp.float32),   # reconstructed
            jax.ShapeDtypeStruct((Bp, Fp), jnp.float32),   # features
            jax.ShapeDtypeStruct((Bp, Dp), jnp.float32),   # activations
        ],
        compiler_params=pltpu.CompilerParams(
            dimension_semantics=("parallel", "arbitrary"),
        ),
        cost_estimate=pl.CostEstimate(
            flops=int(flops),
            transcendentals=int(transcendentals),
            bytes_accessed=int(bytes_accessed),
        ),
    )(pooled_p, wn_p, bn_p, w_p, be_p, bd_p)

    return {
        "reconstructed": rec[:B, :D],
        "features": feat[:B, :F],
        "activations": act[:B, :D],
    }


def saenet_reference(img, mask, params):
    """Pure-JAX reference in the same mixed precision as the kernel."""
    wn, bn, dec_w, be, bd = params
    m = mask[:, None, :, :].astype(img.dtype)
    denom = jnp.maximum(jnp.sum(m, axis=(2, 3)), 1.0)
    pooled = jnp.sum(img * m, axis=(2, 3)) / denom

    act = jnp.tanh(
        jnp.dot(pooled.astype(jnp.bfloat16), wn.astype(jnp.bfloat16),
                preferred_element_type=jnp.float32) + bn
    )
    pre = jnp.dot(act.astype(jnp.bfloat16), dec_w.astype(jnp.bfloat16),
                  preferred_element_type=jnp.float32) + be - 4.0
    feat = jnp.maximum(pre, 0.0) + jnp.log1p(jnp.exp(-jnp.abs(pre)))
    rec = jnp.dot(feat.astype(jnp.bfloat16), dec_w.astype(jnp.bfloat16).T,
                  preferred_element_type=jnp.float32) + bd
    return {"reconstructed": rec, "features": feat, "activations": act}


def init_params(key, in_channels, network_output_dim, n_features):
    """Deterministic parameter construction mirroring SoftSAE.__init__."""
    k1, k2 = jax.random.split(key, 2)
    C, D, F = in_channels, network_output_dim, n_features

    # Frozen synthetic backbone projection (C -> D).
    wn = jax.random.normal(k1, (C, D), jnp.float32) * 0.1
    bn = jnp.zeros((1, D), jnp.float32)

    # dec = nn.Linear(width=F, input_dim=D): dec.weight has shape (D, F).
    dec_v = jax.random.normal(k2, (D, F), jnp.float32) * (1.0 / jnp.sqrt(F))
    # weight_norm(dec, 'weight') with dim=0: weight = g * v / ||v||, and at
    # init g = ||v||, so the effective weight equals dec_v.  The encoder weight
    # is dec.weight.t() cloned at init -> same values; one tied copy carried.
    g = jnp.sqrt(jnp.sum(dec_v * dec_v, axis=1, keepdims=True))
    dec_weight = g * dec_v / jnp.maximum(
        jnp.sqrt(jnp.sum(dec_v * dec_v, axis=1, keepdims=True)), 1e-12
    )                                                   # (D, F)

    be = jnp.zeros((1, F), jnp.float32)                 # enc.bias zero-init
    bd = jnp.zeros((1, D), jnp.float32)                 # dec.bias zero-init
    return (wn, bn, dec_weight, be, bd)


if __name__ == "__main__":
    B, C, H, W = 2, 4, 16, 16
    network_output_dim, n_features = 256, 512   # 128-aligned -> dense MXU tiles

    key = jax.random.PRNGKey(0)
    k_img, k_mask, k_param = jax.random.split(key, 3)

    img = jax.random.normal(k_img, (B, C, H, W), jnp.float32)
    mask = (jax.random.uniform(k_mask, (B, H, W)) > 0.3).astype(jnp.float32)

    params = init_params(k_param, C, network_output_dim, n_features)

    out = saenet_forward(img, mask, params)
    jax.block_until_ready(out)

    assert out["reconstructed"].shape == (B, network_output_dim)
    assert out["features"].shape == (B, n_features)
    assert out["activations"].shape == (B, network_output_dim)
    assert bool(jnp.all(jnp.isfinite(out["reconstructed"])))
    assert bool(jnp.all(jnp.isfinite(out["features"])))
    assert bool(jnp.all(jnp.isfinite(out["activations"])))

    ref = saenet_reference(img, mask, params)
    np.testing.assert_allclose(np.asarray(out["activations"]),
                               np.asarray(ref["activations"]), atol=5e-2, rtol=5e-2)
    np.testing.assert_allclose(np.asarray(out["features"]),
                               np.asarray(ref["features"]), atol=5e-2, rtol=5e-2)
    np.testing.assert_allclose(np.asarray(out["reconstructed"]),
                               np.asarray(ref["reconstructed"]), atol=5e-2, rtol=5e-2)

    print("KERNEL_OK")
</pallas_src>

<mosaic_0001>
module attributes {stable_mosaic.version = 11 : i64} {
  func.func @saenet_kernel(%arg0: i32, %arg1: i32, %arg2: memref<8x128xbf16, #tpu.memory_space<vmem>>, %arg3: memref<128x256xbf16, #tpu.memory_space<vmem>>, %arg4: memref<1x256xf32, #tpu.memory_space<vmem>>, %arg5: memref<256x512xbf16, #tpu.memory_space<vmem>>, %arg6: memref<1x512xf32, #tpu.memory_space<vmem>>, %arg7: memref<1x256xf32, #tpu.memory_space<vmem>>, %arg8: memref<8x256xf32, #tpu.memory_space<vmem>>, %arg9: memref<8x512xf32, #tpu.memory_space<vmem>>, %arg10: memref<8x256xf32, #tpu.memory_space<vmem>>, %arg11: memref<8x256xbf16, #tpu.memory_space<vmem>>, %arg12: memref<8x256xf32, #tpu.memory_space<vmem>>) attributes {dimension_semantics = [#tpu.dimension_semantics<parallel>, #tpu.dimension_semantics<arbitrary>], iteration_bounds = array<i64: 1, 1>, scalar_prefetch = 0 : i64, scratch_operands = 2 : i64, tpu.core_type = #tpu.core_type<tc>, window_params = [{transform_indices = @transform_0, window_bounds = array<i64: 8, 128>}, {pipeline_mode = #tpu.pipeline_mode<synchronous>, transform_indices = @transform_1, window_bounds = array<i64: 128, 256>}, {pipeline_mode = #tpu.pipeline_mode<synchronous>, transform_indices = @transform_2, window_bounds = array<i64: 1, 256>}, {transform_indices = @transform_3, window_bounds = array<i64: 256, 512>}, {transform_indices = @transform_4, window_bounds = array<i64: 1, 512>}, {pipeline_mode = #tpu.pipeline_mode<synchronous>, transform_indices = @transform_5, window_bounds = array<i64: 1, 256>}, {transform_indices = @transform_6, window_bounds = array<i64: 8, 256>}, {transform_indices = @transform_7, window_bounds = array<i64: 8, 512>}, {transform_indices = @transform_8, window_bounds = array<i64: 8, 256>}]} {
    %c0_i32 = arith.constant 0 : i32
    %0 = arith.cmpi eq, %arg1, %c0_i32 : i32
    %1 = arith.extui %0 : i1 to i32
    %c0_i32_0 = arith.constant 0 : i32
    %2 = arith.cmpi ne, %1, %c0_i32_0 : i32
    scf.if %2 {
      %c0_20 = arith.constant 0 : index
      %c0_21 = arith.constant 0 : index
      %29 = vector.load %arg2[%c0_20, %c0_21] : memref<8x128xbf16, #tpu.memory_space<vmem>>, vector<8x128xbf16>
      %c0_22 = arith.constant 0 : index
      %c0_23 = arith.constant 0 : index
      %30 = vector.load %arg3[%c0_22, %c0_23] : memref<128x256xbf16, #tpu.memory_space<vmem>>, vector<128x256xbf16>
      %cst_24 = arith.constant dense<0.000000e+00> : vector<8x256xf32>
      %31 = tpu.matmul %29, %30, %cst_24 {dimension_numbers = #tpu.dot_dimension_numbers<[1], [0], [0], [1], [0, 0, 1, 1], [], []>} : vector<8x128xbf16>, vector<128x256xbf16>, vector<8x256xf32> -> vector<8x256xf32>
      %c0_25 = arith.constant 0 : index
      %c0_26 = arith.constant 0 : index
      %32 = vector.load %arg4[%c0_25, %c0_26] : memref<1x256xf32, #tpu.memory_space<vmem>>, vector<1x256xf32>
      %33 = vector.broadcast %32 : vector<1x256xf32> to vector<8x256xf32>
      %34 = arith.addf %31, %33 : vector<8x256xf32>
      %35 = math.tanh %34 : vector<8x256xf32>
      %c0_27 = arith.constant 0 : index
      %c0_28 = arith.constant 0 : index
      %36 = vector.load %arg10[%c0_27, %c0_28] : memref<8x256xf32, #tpu.memory_space<vmem>>, vector<8x256xf32>
      tpu.vector_store %arg10[%c0_27, %c0_28], %35 {strides = array<i32>} : memref<8x256xf32, #tpu.memory_space<vmem>>, vector<8x256xf32>,
      %37 = arith.truncf %35 : vector<8x256xf32> to vector<8x256xbf16>
      %c0_29 = arith.constant 0 : index
      %c0_30 = arith.constant 0 : index
      %38 = vector.load %arg11[%c0_29, %c0_30] : memref<8x256xbf16, #tpu.memory_space<vmem>>, vector<8x256xbf16>
      tpu.vector_store %arg11[%c0_29, %c0_30], %37 {strides = array<i32>} : memref<8x256xbf16, #tpu.memory_space<vmem>>, vector<8x256xbf16>,
      %cst_31 = arith.constant 0.000000e+00 : f32
      %39 = vector.broadcast %cst_31 : f32 to vector<8x256xf32>
      %c0_32 = arith.constant 0 : index
      %c0_33 = arith.constant 0 : index
      %40 = vector.load %arg12[%c0_32, %c0_33] : memref<8x256xf32, #tpu.memory_space<vmem>>, vector<8x256xf32>
      tpu.vector_store %arg12[%c0_32, %c0_33], %39 {strides = array<i32>} : memref<8x256xf32, #tpu.memory_space<vmem>>, vector<8x256xf32>,
    } else {
    }
    %c0 = arith.constant 0 : index
    %c0_1 = arith.constant 0 : index
    %3 = vector.load %arg11[%c0, %c0_1] : memref<8x256xbf16, #tpu.memory_space<vmem>>, vector<8x256xbf16>
    %c0_2 = arith.constant 0 : index
    %c0_3 = arith.constant 0 : index
    %4 = vector.load %arg5[%c0_2, %c0_3] : memref<256x512xbf16, #tpu.memory_space<vmem>>, vector<256x512xbf16>
    %cst = arith.constant dense<0.000000e+00> : vector<8x512xf32>
    %5 = tpu.matmul %3, %4, %cst {dimension_numbers = #tpu.dot_dimension_numbers<[1], [0], [0], [1], [0, 0, 1, 1], [], []>} : vector<8x256xbf16>, vector<256x512xbf16>, vector<8x512xf32> -> vector<8x512xf32>
    %c0_4 = arith.constant 0 : index
    %c0_5 = arith.constant 0 : index
    %6 = vector.load %arg6[%c0_4, %c0_5] : memref<1x512xf32, #tpu.memory_space<vmem>>, vector<1x512xf32>
    %7 = vector.broadcast %6 : vector<1x512xf32> to vector<8x512xf32>
    %8 = arith.addf %5, %7 : vector<8x512xf32>
    %cst_6 = arith.constant 4.000000e+00 : f32
    %9 = vector.broadcast %cst_6 : f32 to vector<8x512xf32>
    %10 = arith.subf %8, %9 : vector<8x512xf32>
    %cst_7 = arith.constant 0.000000e+00 : f32
    %11 = vector.broadcast %cst_7 : f32 to vector<8x512xf32>
    %12 = arith.maximumf %10, %11 : vector<8x512xf32>
    %13 = math.absf %10 : vector<8x512xf32>
    %cst_8 = arith.constant 0.000000e+00 : f32
    %14 = vector.broadcast %cst_8 : f32 to vector<8x512xf32>
    %15 = arith.subf %14, %13 : vector<8x512xf32>
    %16 = math.exp %15 : vector<8x512xf32>
    %17 = math.log1p %16 : vector<8x512xf32>
    %18 = arith.addf %12, %17 : vector<8x512xf32>
    %c0_9 = arith.constant 0 : index
    %c0_10 = arith.constant 0 : index
    %19 = vector.load %arg9[%c0_9, %c0_10] : memref<8x512xf32, #tpu.memory_space<vmem>>, vector<8x512xf32>
    tpu.vector_store %arg9[%c0_9, %c0_10], %18 {strides = array<i32>} : memref<8x512xf32, #tpu.memory_space<vmem>>, vector<8x512xf32>,
    %c0_11 = arith.constant 0 : index
    %c0_12 = arith.constant 0 : index
    %20 = vector.load %arg12[%c0_11, %c0_12] : memref<8x256xf32, #tpu.memory_space<vmem>>, vector<8x256xf32>
    %21 = arith.truncf %18 : vector<8x512xf32> to vector<8x512xbf16>
    %c0_13 = arith.constant 0 : index
    %c0_14 = arith.constant 0 : index
    %22 = vector.load %arg5[%c0_13, %c0_14] : memref<256x512xbf16, #tpu.memory_space<vmem>>, vector<256x512xbf16>
    %cst_15 = arith.constant dense<0.000000e+00> : vector<8x256xf32>
    %23 = tpu.matmul %21, %22, %cst_15 {dimension_numbers = #tpu.dot_dimension_numbers<[1], [1], [0], [0], [0, 0, 1, 0], [], []>} : vector<8x512xbf16>, vector<256x512xbf16>, vector<8x256xf32> -> vector<8x256xf32>
    %24 = arith.addf %20, %23 : vector<8x256xf32>
    %c0_16 = arith.constant 0 : index
    %c0_17 = arith.constant 0 : index
    %25 = vector.load %arg12[%c0_16, %c0_17] : memref<8x256xf32, #tpu.memory_space<vmem>>, vector<8x256xf32>
    tpu.vector_store %arg12[%c0_16, %c0_17], %24 {strides = array<i32>} : memref<8x256xf32, #tpu.memory_space<vmem>>, vector<8x256xf32>,
    %c0_i32_18 = arith.constant 0 : i32
    %26 = arith.cmpi eq, %arg1, %c0_i32_18 : i32
    %27 = arith.extui %26 : i1 to i32
    %c0_i32_19 = arith.constant 0 : i32
    %28 = arith.cmpi ne, %27, %c0_i32_19 : i32
    scf.if %28 {
      %c0_20 = arith.constant 0 : index
      %c0_21 = arith.constant 0 : index
      %29 = vector.load %arg12[%c0_20, %c0_21] : memref<8x256xf32, #tpu.memory_space<vmem>>, vector<8x256xf32>
      %c0_22 = arith.constant 0 : index
      %c0_23 = arith.constant 0 : index
      %30 = vector.load %arg7[%c0_22, %c0_23] : memref<1x256xf32, #tpu.memory_space<vmem>>, vector<1x256xf32>
      %31 = vector.broadcast %30 : vector<1x256xf32> to vector<8x256xf32>
      %32 = arith.addf %29, %31 : vector<8x256xf32>
      %c0_24 = arith.constant 0 : index
      %c0_25 = arith.constant 0 : index
      %33 = vector.load %arg8[%c0_24, %c0_25] : memref<8x256xf32, #tpu.memory_space<vmem>>, vector<8x256xf32>
      tpu.vector_store %arg8[%c0_24, %c0_25], %32 {strides = array<i32>} : memref<8x256xf32, #tpu.memory_space<vmem>>, vector<8x256xf32>,
    } else {
    }
    return
  }
  func.func @transform_0(%arg0: i32, %arg1: i32) -> (i32, i32) {
    %c0_i32 = arith.constant 0 : i32
    %c0_i32_0 = arith.constant 0 : i32
    return %arg0, %c0_i32 : i32, i32
  }
  func.func @transform_1(%arg0: i32, %arg1: i32) -> (i32, i32) {
    %c0_i32 = arith.constant 0 : i32
    %c0_i32_0 = arith.constant 0 : i32
    %c0_i32_1 = arith.constant 0 : i32
    return %c0_i32, %c0_i32_0 : i32, i32
  }
  func.func @transform_2(%arg0: i32, %arg1: i32) -> (i32, i32) {
    %c0_i32 = arith.constant 0 : i32
    %c0_i32_0 = arith.constant 0 : i32
    %c0_i32_1 = arith.constant 0 : i32
    return %c0_i32, %c0_i32_0 : i32, i32
  }
  func.func @transform_3(%arg0: i32, %arg1: i32) -> (i32, i32) {
    %c0_i32 = arith.constant 0 : i32
    %c0_i32_0 = arith.constant 0 : i32
    return %c0_i32, %arg1 : i32, i32
  }
  func.func @transform_4(%arg0: i32, %arg1: i32) -> (i32, i32) {
    %c0_i32 = arith.constant 0 : i32
    %c0_i32_0 = arith.constant 0 : i32
    return %c0_i32, %arg1 : i32, i32
  }
  func.func @transform_5(%arg0: i32, %arg1: i32) -> (i32, i32) {
    %c0_i32 = arith.constant 0 : i32
    %c0_i32_0 = arith.constant 0 : i32
    %c0_i32_1 = arith.constant 0 : i32
    return %c0_i32, %c0_i32_0 : i32, i32
  }
  func.func @transform_6(%arg0: i32, %arg1: i32) -> (i32, i32) {
    %c0_i32 = arith.constant 0 : i32
    %c0_i32_0 = arith.constant 0 : i32
    return %arg0, %c0_i32 : i32, i32
  }
  func.func @transform_7(%arg0: i32, %arg1: i32) -> (i32, i32) {
    %c0_i32 = arith.constant 0 : i32
    return %arg0, %arg1 : i32, i32
  }
  func.func @transform_8(%arg0: i32, %arg1: i32) -> (i32, i32) {
    %c0_i32 = arith.constant 0 : i32
    %c0_i32_0 = arith.constant 0 : i32
    return %arg0, %c0_i32 : i32, i32
  }
}

</mosaic_0001>

<llo_original>
// kernel: tpu_custom_call.1
$region0: #{tpu_custom_call.1}
  #allocation0 [shape = 'u32[]', space=smem, size = 0x4, offset = 0x4, fixed_abs, tag = 'smem constant byte address 0x4 - core index']
  #allocation1 [shape = 'u32[144,128]{1,0:T(1,128)}', space=vmem, size = 0x12000, scoped, tag = 'internal scratch']
  #allocation2 [shape = 'bf16[8,256]{1,0:T(8,128)(2,1)}', space=vmem, size = 0x1000, scoped, tag = 'scratch operand']
  #allocation3 [shape = 'f32[8,256]{1,0:T(8,128)}', space=vmem, size = 0x2000, scoped, tag = 'scratch operand']
  %s0 = inlined_call_operand.hbm [shape: bf16[8,128], index: 0, kind: input, shape index: {}]
  %s1 = inlined_call_operand.hbm [shape: bf16[128,256], index: 1, kind: input, shape index: {}]
  %s2 = inlined_call_operand.vmem [shape: f32[1,256], index: 2, kind: input, shape index: {}]
  %s3 = inlined_call_operand.hbm [shape: bf16[256,512], index: 3, kind: input, shape index: {}]
  %s4 = inlined_call_operand.vmem [shape: f32[1,512], index: 4, kind: input, shape index: {}]
  %s5 = inlined_call_operand.vmem [shape: f32[1,256], index: 5, kind: input, shape index: {}]
  %s6 = inlined_call_operand.hbm [shape: f32[8,256], index: 6, kind: output, shape index: {0}]
  %s7 = inlined_call_operand.hbm [shape: f32[8,512], index: 7, kind: output, shape index: {1}]
  %s8 = inlined_call_operand.hbm [shape: f32[8,256], index: 8, kind: output, shape index: {2}]
  %9 = xla_tuple %s6, %s7, %s8
  %s10 = sld [smem:[#allocation0]]
  $region70: #{tpu_custom_call.1} parent=0
    _
  %s12 = ssub.s32 1, %s10
  %s13 = scalar_select 0, %s12, %s10
  $region1: #{tpu_custom_call.1} parent=0
    #allocation4 [shape = 'u8[2048]{0}', space=vmem, size = 0x800, scoped, tag = 'input window, operand 0, single buffered']
    #allocation5 [shape = 's32[1]{0}', space=sflag, size = 0x4, scoped, tag = 'scoped memory for tpu_custom_call.1']
    #allocation6 [shape = 's32[1]{0}', space=sflag, size = 0x4, scoped, tag = 'scoped memory for tpu_custom_call.1']
    #allocation7 [shape = 'u8[65536]{0}', space=vmem, size = 0x10000, scoped, tag = 'input window, operand 1, single buffered']
    #allocation8 [shape = 's32[1]{0}', space=sflag, size = 0x4, scoped, tag = 'scoped memory for tpu_custom_call.1']
    #allocation9 [shape = 'u8[262144]{0}', space=vmem, size = 0x40000, scoped, tag = 'input window, operand 3, single buffered']
    #allocation10 [shape = 'u8[8192]{0}', space=vmem, size = 0x2000, scoped, tag = 'output window, operand 0, single buffered']
    #allocation11 [shape = 'u8[16384]{0}', space=vmem, size = 0x4000, scoped, tag = 'output window, operand 1, single buffered']
    #allocation12 [shape = 's32[1]{0}', space=sflag, size = 0x4, scoped, tag = 'scoped memory for tpu_custom_call.1']
    #allocation13 [shape = 'u8[8192]{0}', space=vmem, size = 0x2000, scoped, tag = 'output window, operand 2, single buffered']
    %14 = vsyncpa [#allocation5], 0
    %15 = vsyncpa [#allocation8], 0
    %16 = vsyncpa [#allocation6], 0
    %17 = vsyncpa [#allocation12], 0
    // Predicated region
    $region2: #{tpu_custom_call.1} parent=1 // pred_check
      _
    $region3: #{tpu_custom_call.1} parent=1 // pred_check_branch
      %19 = sbr.rel (0) target = $region5
    $region4: #{tpu_custom_call.1} parent=1 // pred_region
      %s21 = ssub.s32 64, 64
      %22 = vsyncadd [#allocation5], %s21
      %s24 = sshll.u32 [#allocation4], 4
      %s25 = int_to_ptr.vmem [resolvable:$true] %s24
      %27 = dma.hbm_to_vmem [thread:$0]  %s0, 64, %s25, [#allocation5]
    $region5: #{tpu_custom_call.1} parent=1 // pred_fallthru
      _
    // Predicated region
    $region6: #{tpu_custom_call.1} parent=1 // pred_check
      _
    $region7: #{tpu_custom_call.1} parent=1 // pred_check_branch
      %29 = sbr.rel (0) target = $region9
    $region8: #{tpu_custom_call.1} parent=1 // pred_region
      %s31 = ssub.s32 2048, 2048
      %32 = vsyncadd [#allocation8], %s31
      %s33 = sshll.u32 [#allocation7], 4
      %s34 = int_to_ptr.vmem [resolvable:$true] %s33
      %39 = dma.hbm_to_vmem [thread:$0]  %s1, 2048, %s34, [#allocation8], 128, 128, 8
    $region9: #{tpu_custom_call.1} parent=1 // pred_fallthru
      _
    // Predicated region
    $region10: #{tpu_custom_call.1} parent=1 // pred_check
      _
    $region11: #{tpu_custom_call.1} parent=1 // pred_check_branch
      %41 = sbr.rel (0) target = $region13
    $region12: #{tpu_custom_call.1} parent=1 // pred_region
      _
    $region13: #{tpu_custom_call.1} parent=1 // pred_fallthru
      _
    // Predicated region
    $region14: #{tpu_custom_call.1} parent=1 // pred_check
      _
    $region15: #{tpu_custom_call.1} parent=1 // pred_check_branch
      %43 = sbr.rel (0) target = $region17
    $region16: #{tpu_custom_call.1} parent=1 // pred_region
      %s45 = ssub.s32 8192, 8192
      %46 = vsyncadd [#allocation8], %s45
      %s47 = sshll.u32 [#allocation9], 4
      %s48 = int_to_ptr.vmem [resolvable:$true] %s47
      %53 = dma.hbm_to_vmem [thread:$0]  %s3, 8192, %s48, [#allocation8], 256, 256, 16
    $region17: #{tpu_custom_call.1} parent=1 // pred_fallthru
      _
    // Predicated region
    $region18: #{tpu_custom_call.1} parent=1 // pred_check
      _
    $region19: #{tpu_custom_call.1} parent=1 // pred_check_branch
      %55 = sbr.rel (0) target = $region21
    $region20: #{tpu_custom_call.1} parent=1 // pred_region
      _
    $region21: #{tpu_custom_call.1} parent=1 // pred_fallthru
      _
    // Predicated region
    $region22: #{tpu_custom_call.1} parent=1 // pred_check
      _
    $region23: #{tpu_custom_call.1} parent=1 // pred_check_branch
      %57 = sbr.rel (0) target = $region25
    $region24: #{tpu_custom_call.1} parent=1 // pred_region
      _
    $region25: #{tpu_custom_call.1} parent=1 // pred_fallthru
      _
    // Predicated region
    $region26: #{tpu_custom_call.1} parent=1 // pred_check
      _
    $region27: #{tpu_custom_call.1} parent=1 // pred_check_branch
      %59 = sbr.rel (0) target = $region29
    $region28: #{tpu_custom_call.1} parent=1 // pred_region
      %60 = dma.done [#allocation5], 64
    $region29: #{tpu_custom_call.1} parent=1 // pred_fallthru
      _
    // Predicated region
    $region30: #{tpu_custom_call.1} parent=1 // pred_check
      _
    $region31: #{tpu_custom_call.1} parent=1 // pred_check_branch
      %62 = sbr.rel (0) target = $region33
    $region32: #{tpu_custom_call.1} parent=1 // pred_region
      %63 = dma.done [#allocation8], 2048
    $region33: #{tpu_custom_call.1} parent=1 // pred_fallthru
      _
    // Predicated region
    $region34: #{tpu_custom_call.1} parent=1 // pred_check
      _
    $region35: #{tpu_custom_call.1} parent=1 // pred_check_branch
      %65 = sbr.rel (0) target = $region37
    $region36: #{tpu_custom_call.1} parent=1 // pred_region
      %66 = dma.done [#allocation8], 8192
    $region37: #{tpu_custom_call.1} parent=1 // pred_fallthru
      _
    %p68 = scmp.eq.s32.totalorder 0, 0
    // Predicated region
    $region38: #{tpu_custom_call.1} parent=1 // pred_check
      %p69 = pneg %p68
    $region39: #{tpu_custom_call.1} parent=1 // pred_check_branch
      %71 = sbr.rel (%p69) target = $region41
    $region40: #{tpu_custom_call.1} parent=1 // pred_region
      %v72 = vld [vmem:[#allocation4] sm:$0xf]
      %v73 = vld [vmem:[#allocation7] sm:$0xff]
      %v74 = vld [vmem:[#allocation7 + $0x8] sm:$0xff]
      %v75 = vld [vmem:[#allocation7 + $0x10] sm:$0xff]
      %v76 = vld [vmem:[#allocation7 + $0x18] sm:$0xff]
      %v77 = vld [vmem:[#allocation7 + $0x20] sm:$0xff]
      %v78 = vld [vmem:[#allocation7 + $0x28] sm:$0xff]
      %v79 = vld [vmem:[#allocation7 + $0x30] sm:$0xff]
      %v80 = vld [vmem:[#allocation7 + $0x38] sm:$0xff]
      %v81 = vld [vmem:[#allocation7 + $0x40] sm:$0xff]
      %v82 = vld [vmem:[#allocation7 + $0x48] sm:$0xff]
      %v83 = vld [vmem:[#allocation7 + $0x50] sm:$0xff]
      %v84 = vld [vmem:[#allocation7 + $0x58] sm:$0xff]
      %v85 = vld [vmem:[#allocation7 + $0x60] sm:$0xff]
      %v86 = vld [vmem:[#allocation7 + $0x68] sm:$0xff]
      %v87 = vld [vmem:[#allocation7 + $0x70] sm:$0xff]
      %v88 = vld [vmem:[#allocation7 + $0x78] sm:$0xff]
      %v89 = vld [vmem:[%s2] sm:$0x3]
      %v91 = vlaneseq
      %v92 = vshrl.u32 %v91, 7
      %v93 = vsub.s32 0, %v92
      %v94 = vrot.slane %v89, %v93
      %v95 = vlaneseq
      %v96 = vshrl.u32 %v95, 7
      %v97 = vsub.s32 1, %v96
      %v98 = vrot.slane %v89, %v97
      %v117 = vunpack.c.l.b16 %v73
      %v118 = vunpack.c.h.b16 %v73
      %v119 = vunpack.c.l.b16 %v74
      %v120 = vunpack.c.h.b16 %v74
      %v121 = vunpack.c.l.b16 %v75
      %v122 = vunpack.c.h.b16 %v75
      %v123 = vunpack.c.l.b16 %v76
      %v124 = vunpack.c.h.b16 %v76
      %v125 = vunpack.c.l.b16 %v77
      %v126 = vunpack.c.h.b16 %v77
      %v127 = vunpack.c.l.b16 %v78
      %v128 = vunpack.c.h.b16 %v78
      %v129 = vunpack.c.l.b16 %v79
      %v130 = vunpack.c.h.b16 %v79
      %v131 = vunpack.c.l.b16 %v80
      %v132 = vunpack.c.h.b16 %v80
      %v133 = vunpack.c.l.b16 %v81
      %v134 = vunpack.c.h.b16 %v81
      %v135 = vunpack.c.l.b16 %v82
      %v136 = vunpack.c.h.b16 %v82
      %v137 = vunpack.c.l.b16 %v83
      %v138 = vunpack.c.h.b16 %v83
      %v139 = vunpack.c.l.b16 %v84
      %v140 = vunpack.c.h.b16 %v84
      %v141 = vunpack.c.l.b16 %v85
      %v142 = vunpack.c.h.b16 %v85
      %v143 = vunpack.c.l.b16 %v86
      %v144 = vunpack.c.h.b16 %v86
      %v145 = vunpack.c.l.b16 %v87
      %v146 = vunpack.c.h.b16 %v87
      %v147 = vunpack.c.l.b16 %v88
      %v148 = vunpack.c.h.b16 %v88
      %v149 = vpack.c.b16 %v119, %v117
      %v150 = vpack.c.b16 %v120, %v118
      %v151 = vpack.c.b16 %v123, %v121
      %v152 = vpack.c.b16 %v124, %v122
      %v153 = vpack.c.b16 %v127, %v125
      %v154 = vpack.c.b16 %v128, %v126
      %v155 = vpack.c.b16 %v131, %v129
      %v156 = vpack.c.b16 %v132, %v130
      %v157 = vpack.c.b16 %v135, %v133
      %v158 = vpack.c.b16 %v136, %v134
      %v159 = vpack.c.b16 %v139, %v137
      %v160 = vpack.c.b16 %v140, %v138
      %v161 = vpack.c.b16 %v143, %v141
      %v162 = vpack.c.b16 %v144, %v142
      %v163 = vpack.c.b16 %v147, %v145
      %v164 = vpack.c.b16 %v148, %v146
      %181 = vmatprep.subr.bf16.mxu0 %v150
      %182 = vmatpush1.bf16.msra.mxu0 %v149
      %183 = vmatprep.subr.bf16.mxu0 %v152
      %184 = vmatpush1.bf16.msra.mxu0 %v151
      %185 = vmatprep.subr.bf16.mxu0 %v154
      %186 = vmatpush1.bf16.msra.mxu0 %v153
      %187 = vmatprep.subr.bf16.mxu0 %v156
      %188 = vmatpush1.bf16.msra.mxu0 %v155
      %189 = vmatprep.subr.bf16.mxu0 %v158
      %190 = vmatpush1.bf16.msra.mxu0 %v157
      %191 = vmatprep.subr.bf16.mxu0 %v160
      %192 = vmatpush1.bf16.msra.mxu0 %v159
      %193 = vmatprep.subr.bf16.mxu0 %v162
      %194 = vmatpush1.bf16.msra.mxu0 %v161
      %195 = vmatprep.subr.bf16.mxu0 %v164
      %196 = vmatpush1.bf16.msra.mxu0 %v163
      %197 = vmatprep.subr.bf16.mxu0 0
      %198 = vmatpush1.bf16.msra.mxu0 0
      %199 = vmatprep.subr.bf16.mxu0 0
      %200 = vmatpush1.bf16.msra.mxu0 0
      %201 = vmatprep.subr.bf16.mxu0 0
      %202 = vmatpush1.bf16.msra.mxu0 0
      %203 = vmatprep.subr.bf16.mxu0 0
      %204 = vmatpush1.bf16.msra.mxu0 0
      %205 = vmatprep.subr.bf16.mxu0 0
      %206 = vmatpush1.bf16.msra.mxu0 0
      %207 = vmatprep.subr.bf16.mxu0 0
      %208 = vmatpush1.bf16.msra.mxu0 0
      %209 = vmatprep.subr.bf16.mxu0 0
      %210 = vmatpush1.bf16.msra.mxu0 0
      %211 = vmatprep.subr.bf16.mxu0 0
      %212 = vmatpush1.bf16.msra.mxu0 0
      %213 = vmatprep.mubr.bf16.mxu0 0
      %214 = vmatmul.mubr.bf16.gmra.mrb[0].mxu0 %v72
      %v215 = vpop.f32.mrb[0].mxu0
      %v216 = vadd.f32 %v94, %v215
      %v217 = vpop.f32.mrb[0].mxu0
      %v218 = vadd.f32 %v98, %v217
      %v219 = vpop.f32.mrb[0].mxu0
      %v220 = vpop.f32.mrb[0].mxu0
      %221 = vdwg.mxu0
      %v222 = vtanh.pop %v216
      %v223 = vtanh.pop %v218
      %224 = vst [vmem:[#allocation13] sm:$0xff] %v222
      %225 = vst [vmem:[#allocation13 + $0x8] sm:$0xff] %v223
      %v226 = vpack.c.bf16 %v222, %v222
      %v227 = vpack.c.bf16 %v223, %v223
      %v230 = vunpack.c.l.b16 %v226
      %v231 = vunpack.c.l.b16 %v227
      %v232 = vpack.c.b16 %v231, %v230
      %234 = vst [vmem:[#allocation2] sm:$0xff] %v232
      %235 = vst [vmem:[#allocation3] sm:$0xff] 0.0
      %236 = vst [vmem:[#allocation3 + $0x8] sm:$0xff] 0.0
    $region41: #{tpu_custom_call.1} parent=1 // pred_fallthru
      _
    %v237 = vld [vmem:[#allocation2] sm:$0xff]
    %v238 = vld [vmem:[#allocation9] sm:$0xff]
    %v239 = vld [vmem:[#allocation9 + $0x8] sm:$0xff]
    %v240 = vld [vmem:[#allocation9 + $0x10] sm:$0xff]
    %v241 = vld [vmem:[#allocation9 + $0x18] sm:$0xff]
    %v242 = vld [vmem:[#allocation9 + $0x20] sm:$0xff]
    %v243 = vld [vmem:[#allocation9 + $0x28] sm:$0xff]
    %v244 = vld [vmem:[#allocation9 + $0x30] sm:$0xff]
    %v245 = vld [vmem:[#allocation9 + $0x38] sm:$0xff]
    %v246 = vld [vmem:[#allocation9 + $0x40] sm:$0xff]
    %v247 = vld [vmem:[#allocation9 + $0x48] sm:$0xff]
    %v248 = vld [vmem:[#allocation9 + $0x50] sm:$0xff]
    %v249 = vld [vmem:[#allocation9 + $0x58] sm:$0xff]
    %v250 = vld [vmem:[#allocation9 + $0x60] sm:$0xff]
    %v251 = vld [vmem:[#allocation9 + $0x68] sm:$0xff]
    %v252 = vld [vmem:[#allocation9 + $0x70] sm:$0xff]
    %v253 = vld [vmem:[#allocation9 + $0x78] sm:$0xff]
    %v254 = vld [vmem:[#allocation9 + $0x80] sm:$0xff]
    %v255 = vld [vmem:[#allocation9 + $0x88] sm:$0xff]
    %v256 = vld [vmem:[#allocation9 + $0x90] sm:$0xff]
    %v257 = vld [vmem:[#allocation9 + $0x98] sm:$0xff]
    %v258 = vld [vmem:[#allocation9 + $0xa0] sm:$0xff]
    %v259 = vld [vmem:[#allocation9 + $0xa8] sm:$0xff]
    %v260 = vld [vmem:[#allocation9 + $0xb0] sm:$0xff]
    %v261 = vld [vmem:[#allocation9 + $0xb8] sm:$0xff]
    %v262 = vld [vmem:[#allocation9 + $0xc0] sm:$0xff]
    %v263 = vld [vmem:[#allocation9 + $0xc8] sm:$0xff]
    %v264 = vld [vmem:[#allocation9 + $0xd0] sm:$0xff]
    %v265 = vld [vmem:[#allocation9 + $0xd8] sm:$0xff]
    %v266 = vld [vmem:[#allocation9 + $0xe0] sm:$0xff]
    %v267 = vld [vmem:[#allocation9 + $0xe8] sm:$0xff]
    %v268 = vld [vmem:[#allocation9 + $0xf0] sm:$0xff]
    %v269 = vld [vmem:[#allocation9 + $0xf8] sm:$0xff]
    %v270 = vld [vmem:[#allocation9 + $0x100] sm:$0xff]
    %v271 = vld [vmem:[#allocation9 + $0x108] sm:$0xff]
    %v272 = vld [vmem:[#allocation9 + $0x110] sm:$0xff]
    %v273 = vld [vmem:[#allocation9 + $0x118] sm:$0xff]
    %v274 = vld [vmem:[#allocation9 + $0x120] sm:$0xff]
    %v275 = vld [vmem:[#allocation9 + $0x128] sm:$0xff]
    %v276 = vld [vmem:[#allocation9 + $0x130] sm:$0xff]
    %v277 = vld [vmem:[#allocation9 + $0x138] sm:$0xff]
    %v278 = vld [vmem:[#allocation9 + $0x140] sm:$0xff]
    %v279 = vld [vmem:[#allocation9 + $0x148] sm:$0xff]
    %v280 = vld [vmem:[#allocation9 + $0x150] sm:$0xff]
    %v281 = vld [vmem:[#allocation9 + $0x158] sm:$0xff]
    %v282 = vld [vmem:[#allocation9 + $0x160] sm:$0xff]
    %v283 = vld [vmem:[#allocation9 + $0x168] sm:$0xff]
    %v284 = vld [vmem:[#allocation9 + $0x170] sm:$0xff]
    %v285 = vld [vmem:[#allocation9 + $0x178] sm:$0xff]
    %v286 = vld [vmem:[#allocation9 + $0x180] sm:$0xff]
    %v287 = vld [vmem:[#allocation9 + $0x188] sm:$0xff]
    %v288 = vld [vmem:[#allocation9 + $0x190] sm:$0xff]
    %v289 = vld [vmem:[#allocation9 + $0x198] sm:$0xff]
    %v290 = vld [vmem:[#allocation9 + $0x1a0] sm:$0xff]
    %v291 = vld [vmem:[#allocation9 + $0x1a8] sm:$0xff]
    %v292 = vld [vmem:[#allocation9 + $0x1b0] sm:$0xff]
    %v293 = vld [vmem:[#allocation9 + $0x1b8] sm:$0xff]
    %v294 = vld [vmem:[#allocation9 + $0x1c0] sm:$0xff]
    %v295 = vld [vmem:[#allocation9 + $0x1c8] sm:$0xff]
    %v296 = vld [vmem:[#allocation9 + $0x1d0] sm:$0xff]
    %v297 = vld [vmem:[#allocation9 + $0x1d8] sm:$0xff]
    %v298 = vld [vmem:[#allocation9 + $0x1e0] sm:$0xff]
    %v299 = vld [vmem:[#allocation9 + $0x1e8] sm:$0xff]
    %v300 = vld [vmem:[#allocation9 + $0x1f0] sm:$0xff]
    %v301 = vld [vmem:[#allocation9 + $0x1f8] sm:$0xff]
    %v302 = vld [vmem:[%s4] sm:$0xf]
    %v304 = vlaneseq
    %v305 = vshrl.u32 %v304, 7
    %v306 = vsub.s32 0, %v305
    %v307 = vrot.slane %v302, %v306
    %v308 = vlaneseq
    %v309 = vshrl.u32 %v308, 7
    %v310 = vsub.s32 1, %v309
    %v311 = vrot.slane %v302, %v310
    %v312 = vlaneseq
    %v313 = vshrl.u32 %v312, 7
    %v314 = vsub.s32 2, %v313
    %v315 = vrot.slane %v302, %v314
    %v316 = vlaneseq
    %v317 = vshrl.u32 %v316, 7
    %v318 = vsub.s32 3, %v317
    %v319 = vrot.slane %v302, %v318
    %v325 = vunpack.c.l.b16 %v237
    %v326 = vunpack.c.h.b16 %v237
    %v327 = vpack.c.b16 %v325, %v325
    %v328 = vpack.c.b16 %v326, %v326
    %v395 = vunpack.c.l.b16 %v238
    %v396 = vunpack.c.h.b16 %v238
    %v397 = vunpack.c.l.b16 %v239
    %v398 = vunpack.c.h.b16 %v239
    %v399 = vunpack.c.l.b16 %v240
    %v400 = vunpack.c.h.b16 %v240
    %v401 = vunpack.c.l.b16 %v241
    %v402 = vunpack.c.h.b16 %v241
    %v403 = vunpack.c.l.b16 %v242
    %v404 = vunpack.c.h.b16 %v242
    %v405 = vunpack.c.l.b16 %v243
    %v406 = vunpack.c.h.b16 %v243
    %v407 = vunpack.c.l.b16 %v244
    %v408 = vunpack.c.h.b16 %v244
    %v409 = vunpack.c.l.b16 %v245
    %v410 = vunpack.c.h.b16 %v245
    %v411 = vunpack.c.l.b16 %v246
    %v412 = vunpack.c.h.b16 %v246
    %v413 = vunpack.c.l.b16 %v247
    %v414 = vunpack.c.h.b16 %v247
    %v415 = vunpack.c.l.b16 %v248
    %v416 = vunpack.c.h.b16 %v248
    %v417 = vunpack.c.l.b16 %v249
    %v418 = vunpack.c.h.b16 %v249
    %v419 = vunpack.c.l.b16 %v250
    %v420 = vunpack.c.h.b16 %v250
    %v421 = vunpack.c.l.b16 %v251
    %v422 = vunpack.c.h.b16 %v251
    %v423 = vunpack.c.l.b16 %v252
    %v424 = vunpack.c.h.b16 %v252
    %v425 = vunpack.c.l.b16 %v253
    %v426 = vunpack.c.h.b16 %v253
    %v427 = vunpack.c.l.b16 %v254
    %v428 = vunpack.c.h.b16 %v254
    %v429 = vunpack.c.l.b16 %v255
    %v430 = vunpack.c.h.b16 %v255
    %v431 = vunpack.c.l.b16 %v256
    %v432 = vunpack.c.h.b16 %v256
    %v433 = vunpack.c.l.b16 %v257
    %v434 = vunpack.c.h.b16 %v257
    %v435 = vunpack.c.l.b16 %v258
    %v436 = vunpack.c.h.b16 %v258
    %v437 = vunpack.c.l.b16 %v259
    %v438 = vunpack.c.h.b16 %v259
    %v439 = vunpack.c.l.b16 %v260
    %v440 = vunpack.c.h.b16 %v260
    %v441 = vunpack.c.l.b16 %v261
    %v442 = vunpack.c.h.b16 %v261
    %v443 = vunpack.c.l.b16 %v262
    %v444 = vunpack.c.h.b16 %v262
    %v445 = vunpack.c.l.b16 %v263
    %v446 = vunpack.c.h.b16 %v263
    %v447 = vunpack.c.l.b16 %v264
    %v448 = vunpack.c.h.b16 %v264
    %v449 = vunpack.c.l.b16 %v265
    %v450 = vunpack.c.h.b16 %v265
    %v451 = vunpack.c.l.b16 %v266
    %v452 = vunpack.c.h.b16 %v266
    %v453 = vunpack.c.l.b16 %v267
    %v454 = vunpack.c.h.b16 %v267
    %v455 = vunpack.c.l.b16 %v268
    %v456 = vunpack.c.h.b16 %v268
    %v457 = vunpack.c.l.b16 %v269
    %v458 = vunpack.c.h.b16 %v269
    %v459 = vunpack.c.l.b16 %v270
    %v460 = vunpack.c.h.b16 %v270
    %v461 = vunpack.c.l.b16 %v271
    %v462 = vunpack.c.h.b16 %v271
    %v463 = vunpack.c.l.b16 %v272
    %v464 = vunpack.c.h.b16 %v272
    %v465 = vunpack.c.l.b16 %v273
    %v466 = vunpack.c.h.b16 %v273
    %v467 = vunpack.c.l.b16 %v274
    %v468 = vunpack.c.h.b16 %v274
    %v469 = vunpack.c.l.b16 %v275
    %v470 = vunpack.c.h.b16 %v275
    %v471 = vunpack.c.l.b16 %v276
    %v472 = vunpack.c.h.b16 %v276
    %v473 = vunpack.c.l.b16 %v277
    %v474 = vunpack.c.h.b16 %v277
    %v475 = vunpack.c.l.b16 %v278
    %v476 = vunpack.c.h.b16 %v278
    %v477 = vunpack.c.l.b16 %v279
    %v478 = vunpack.c.h.b16 %v279
    %v479 = vunpack.c.l.b16 %v280
    %v480 = vunpack.c.h.b16 %v280
    %v481 = vunpack.c.l.b16 %v281
    %v482 = vunpack.c.h.b16 %v281
    %v483 = vunpack.c.l.b16 %v282
    %v484 = vunpack.c.h.b16 %v282
    %v485 = vunpack.c.l.b16 %v283
    %v486 = vunpack.c.h.b16 %v283
    %v487 = vunpack.c.l.b16 %v284
    %v488 = vunpack.c.h.b16 %v284
    %v489 = vunpack.c.l.b16 %v285
    %v490 = vunpack.c.h.b16 %v285
    %v491 = vunpack.c.l.b16 %v286
    %v492 = vunpack.c.h.b16 %v286
    %v493 = vunpack.c.l.b16 %v287
    %v494 = vunpack.c.h.b16 %v287
    %v495 = vunpack.c.l.b16 %v288
    %v496 = vunpack.c.h.b16 %v288
    %v497 = vunpack.c.l.b16 %v289
    %v498 = vunpack.c.h.b16 %v289
    %v499 = vunpack.c.l.b16 %v290
    %v500 = vunpack.c.h.b16 %v290
    %v501 = vunpack.c.l.b16 %v291
    %v502 = vunpack.c.h.b16 %v291
    %v503 = vunpack.c.l.b16 %v292
    %v504 = vunpack.c.h.b16 %v292
    %v505 = vunpack.c.l.b16 %v293
    %v506 = vunpack.c.h.b16 %v293
    %v507 = vunpack.c.l.b16 %v294
    %v508 = vunpack.c.h.b16 %v294
    %v509 = vunpack.c.l.b16 %v295
    %v510 = vunpack.c.h.b16 %v295
    %v511 = vunpack.c.l.b16 %v296
    %v512 = vunpack.c.h.b16 %v296
    %v513 = vunpack.c.l.b16 %v297
    %v514 = vunpack.c.h.b16 %v297
    %v515 = vunpack.c.l.b16 %v298
    %v516 = vunpack.c.h.b16 %v298
    %v517 = vunpack.c.l.b16 %v299
    %v518 = vunpack.c.h.b16 %v299
    %v519 = vunpack.c.l.b16 %v300
    %v520 = vunpack.c.h.b16 %v300
    %v521 = vunpack.c.l.b16 %v301
    %v522 = vunpack.c.h.b16 %v301
    %v523 = vpack.c.b16 %v399, %v395
    %v524 = vpack.c.b16 %v400, %v396
    %v525 = vpack.c.b16 %v401, %v397
    %v526 = vpack.c.b16 %v402, %v398
    %v527 = vpack.c.b16 %v407, %v403
    %v528 = vpack.c.b16 %v408, %v404
    %v529 = vpack.c.b16 %v409, %v405
    %v530 = vpack.c.b16 %v410, %v406
    %v531 = vpack.c.b16 %v415, %v411
    %v532 = vpack.c.b16 %v416, %v412
    %v533 = vpack.c.b16 %v417, %v413
    %v534 = vpack.c.b16 %v418, %v414
    %v535 = vpack.c.b16 %v423, %v419
    %v536 = vpack.c.b16 %v424, %v420
    %v537 = vpack.c.b16 %v425, %v421
    %v538 = vpack.c.b16 %v426, %v422
    %v539 = vpack.c.b16 %v431, %v427
    %v540 = vpack.c.b16 %v432, %v428
    %v541 = vpack.c.b16 %v433, %v429
    %v542 = vpack.c.b16 %v434, %v430
    %v543 = vpack.c.b16 %v439, %v435
    %v544 = vpack.c.b16 %v440, %v436
    %v545 = vpack.c.b16 %v441, %v437
    %v546 = vpack.c.b16 %v442, %v438
    %v547 = vpack.c.b16 %v447, %v443
    %v548 = vpack.c.b16 %v448, %v444
    %v549 = vpack.c.b16 %v449, %v445
    %v550 = vpack.c.b16 %v450, %v446
    %v551 = vpack.c.b16 %v455, %v451
    %v552 = vpack.c.b16 %v456, %v452
    %v553 = vpack.c.b16 %v457, %v453
    %v554 = vpack.c.b16 %v458, %v454
    %v555 = vpack.c.b16 %v463, %v459
    %v556 = vpack.c.b16 %v464, %v460
    %v557 = vpack.c.b16 %v465, %v461
    %v558 = vpack.c.b16 %v466, %v462
    %v559 = vpack.c.b16 %v471, %v467
    %v560 = vpack.c.b16 %v472, %v468
    %v561 = vpack.c.b16 %v473, %v469
    %v562 = vpack.c.b16 %v474, %v470
    %v563 = vpack.c.b16 %v479, %v475
    %v564 = vpack.c.b16 %v480, %v476
    %v565 = vpack.c.b16 %v481, %v477
    %v566 = vpack.c.b16 %v482, %v478
    %v567 = vpack.c.b16 %v487, %v483
    %v568 = vpack.c.b16 %v488, %v484
    %v569 = vpack.c.b16 %v489, %v485
    %v570 = vpack.c.b16 %v490, %v486
    %v571 = vpack.c.b16 %v495, %v491
    %v572 = vpack.c.b16 %v496, %v492
    %v573 = vpack.c.b16 %v497, %v493
    %v574 = vpack.c.b16 %v498, %v494
    %v575 = vpack.c.b16 %v503, %v499
    %v576 = vpack.c.b16 %v504, %v500
    %v577 = vpack.c.b16 %v505, %v501
    %v578 = vpack.c.b16 %v506, %v502
    %v579 = vpack.c.b16 %v511, %v507
    %v580 = vpack.c.b16 %v512, %v508
    %v581 = vpack.c.b16 %v513, %v509
    %v582 = vpack.c.b16 %v514, %v510
    %v583 = vpack.c.b16 %v519, %v515
    %v584 = vpack.c.b16 %v520, %v516
    %v585 = vpack.c.b16 %v521, %v517
    %v586 = vpack.c.b16 %v522, %v518
    %651 = vmatprep.subr.bf16.mxu0 %v524
    %652 = vmatpush1.bf16.msra.mxu0 %v523
    %653 = vmatprep.subr.bf16.mxu0 %v528
    %654 = vmatpush1.bf16.msra.mxu0 %v527
    %655 = vmatprep.subr.bf16.mxu0 %v532
    %656 = vmatpush1.bf16.msra.mxu0 %v531
    %657 = vmatprep.subr.bf16.mxu0 %v536
    %658 = vmatpush1.bf16.msra.mxu0 %v535
    %659 = vmatprep.subr.bf16.mxu0 %v540
    %660 = vmatpush1.bf16.msra.mxu0 %v539
    %661 = vmatprep.subr.bf16.mxu0 %v544
    %662 = vmatpush1.bf16.msra.mxu0 %v543
    %663 = vmatprep.subr.bf16.mxu0 %v548
    %664 = vmatpush1.bf16.msra.mxu0 %v547
    %665 = vmatprep.subr.bf16.mxu0 %v552
    %666 = vmatpush1.bf16.msra.mxu0 %v551
    %667 = vmatprep.subr.bf16.mxu0 %v556
    %668 = vmatpush1.bf16.msra.mxu0 %v555
    %669 = vmatprep.subr.bf16.mxu0 %v560
    %670 = vmatpush1.bf16.msra.mxu0 %v559
    %671 = vmatprep.subr.bf16.mxu0 %v564
    %672 = vmatpush1.bf16.msra.mxu0 %v563
    %673 = vmatprep.subr.bf16.mxu0 %v568
    %674 = vmatpush1.bf16.msra.mxu0 %v567
    %675 = vmatprep.subr.bf16.mxu0 %v572
    %676 = vmatpush1.bf16.msra.mxu0 %v571
    %677 = vmatprep.subr.bf16.mxu0 %v576
    %678 = vmatpush1.bf16.msra.mxu0 %v575
    %679 = vmatprep.subr.bf16.mxu0 %v580
    %680 = vmatpush1.bf16.msra.mxu0 %v579
    %681 = vmatprep.subr.bf16.mxu0 %v584
    %682 = vmatpush1.bf16.msra.mxu0 %v583
    %683 = vmatprep.mubr.bf16.mxu0 %v328
    %684 = vmatmul.mubr.bf16.gmra.mrb[0].mxu0 %v327
    %v685 = vpop.f32.mrb[0].mxu0
    %v686 = vadd.f32 %v307, %v685
    %v687 = vpop.f32.mrb[0].mxu0
    %v688 = vadd.f32 %v311, %v687
    %v689 = vpop.f32.mrb[0].mxu0
    %v690 = vpop.f32.mrb[0].mxu0
    %691 = vdwg.mxu0
    %692 = vmatprep.subr.bf16.mxu0 %v526
    %693 = vmatpush1.bf16.msra.mxu0 %v525
    %694 = vmatprep.subr.bf16.mxu0 %v530
    %695 = vmatpush1.bf16.msra.mxu0 %v529
    %696 = vmatprep.subr.bf16.mxu0 %v534
    %697 = vmatpush1.bf16.msra.mxu0 %v533
    %698 = vmatprep.subr.bf16.mxu0 %v538
    %699 = vmatpush1.bf16.msra.mxu0 %v537
    %700 = vmatprep.subr.bf16.mxu0 %v542
    %701 = vmatpush1.bf16.msra.mxu0 %v541
    %702 = vmatprep.subr.bf16.mxu0 %v546
    %703 = vmatpush1.bf16.msra.mxu0 %v545
    %704 = vmatprep.subr.bf16.mxu0 %v550
    %705 = vmatpush1.bf16.msra.mxu0 %v549
    %706 = vmatprep.subr.bf16.mxu0 %v554
    %707 = vmatpush1.bf16.msra.mxu0 %v553
    %708 = vmatprep.subr.bf16.mxu0 %v558
    %709 = vmatpush1.bf16.msra.mxu0 %v557
    %710 = vmatprep.subr.bf16.mxu0 %v562
    %711 = vmatpush1.bf16.msra.mxu0 %v561
    %712 = vmatprep.subr.bf16.mxu0 %v566
    %713 = vmatpush1.bf16.msra.mxu0 %v565
    %714 = vmatprep.subr.bf16.mxu0 %v570
    %715 = vmatpush1.bf16.msra.mxu0 %v569
    %716 = vmatprep.subr.bf16.mxu0 %v574
    %717 = vmatpush1.bf16.msra.mxu0 %v573
    %718 = vmatprep.subr.bf16.mxu0 %v578
    %719 = vmatpush1.bf16.msra.mxu0 %v577
    %720 = vmatprep.subr.bf16.mxu0 %v582
    %721 = vmatpush1.bf16.msra.mxu0 %v581
    %722 = vmatprep.subr.bf16.mxu0 %v586
    %723 = vmatpush1.bf16.msra.mxu0 %v585
    %724 = vmatprep.mubr.bf16.mxu0 %v328
    %725 = vmatmul.mubr.bf16.gmra.mrb[0].mxu0 %v327
    %v726 = vpop.f32.mrb[0].mxu0
    %v727 = vadd.f32 %v315, %v726
    %v728 = vpop.f32.mrb[0].mxu0
    %v729 = vadd.f32 %v319, %v728
    %v730 = vpop.f32.mrb[0].mxu0
    %v731 = vpop.f32.mrb[0].mxu0
    %732 = vdwg.mxu0
    %v733 = vsub.f32 %v686, 4.0
    %v734 = vsub.f32 %v688, 4.0
    %v735 = vsub.f32 %v727, 4.0
    %v736 = vsub.f32 %v729, 4.0
    %v737 = vmax.f32 %v733, 0.0
    %v738 = vmax.f32 %v734, 0.0
    %v739 = vmax.f32 %v735, 0.0
    %v740 = vmax.f32 %v736, 0.0
    %v741 = vand.u32 2147483647, %v733
    %v742 = vand.u32 2147483647, %v734
    %v743 = vand.u32 2147483647, %v735
    %v744 = vand.u32 2147483647, %v736
    %v745 = vsub.f32 0.0, %v741
    %v746 = vsub.f32 0.0, %v742
    %v747 = vsub.f32 0.0, %v743
    %v748 = vsub.f32 0.0, %v744
    %v749 = vmul.f32 %v745, 1.442695
    %v750 = vpow.pop %v749
    %v751 = vmul.f32 %v746, 1.442695
    %v752 = vpow.pop %v751
    %v753 = vmul.f32 %v747, 1.442695
    %v754 = vpow.pop %v753
    %v755 = vmul.f32 %v748, 1.442695
    %v756 = vpow.pop %v755
    %v757 = vadd.f32 %v750, 1.0
    %v758 = vlog2.pop %v757
    %v759 = vmul.f32 %v758, 0.6931472
    %v760 = vmul.f32 -0.5, %v750
    %v761 = vadd.f32 %v760, 1.0
    %v762 = vmul.f32 %v761, %v750
    %v763 = vand.u32 2147483647, %v750
    %vm764 = vcmp.lt.f32.partialorder %v763, 0.0004427343
    %v765 = vsel %vm764, %v762, %v759
    %v766 = vadd.f32 %v752, 1.0
    %v767 = vlog2.pop %v766
    %v768 = vmul.f32 %v767, 0.6931472
    %v769 = vmul.f32 -0.5, %v752
    %v770 = vadd.f32 %v769, 1.0
    %v771 = vmul.f32 %v770, %v752
    %v772 = vand.u32 2147483647, %v752
    %vm773 = vcmp.lt.f32.partialorder %v772, 0.0004427343
    %v774 = vsel %vm773, %v771, %v768
    %v775 = vadd.f32 %v754, 1.0
    %v776 = vlog2.pop %v775
    %v777 = vmul.f32 %v776, 0.6931472
    %v778 = vmul.f32 -0.5, %v754
    %v779 = vadd.f32 %v778, 1.0
    %v780 = vmul.f32 %v779, %v754
    %v781 = vand.u32 2147483647, %v754
    %vm782 = vcmp.lt.f32.partialorder %v781, 0.0004427343
    %v783 = vsel %vm782, %v780, %v777
    %v784 = vadd.f32 %v756, 1.0
    %v785 = vlog2.pop %v784
    %v786 = vmul.f32 %v785, 0.6931472
    %v787 = vmul.f32 -0.5, %v756
    %v788 = vadd.f32 %v787, 1.0
    %v789 = vmul.f32 %v788, %v756
    %v790 = vand.u32 2147483647, %v756
    %vm791 = vcmp.lt.f32.partialorder %v790, 0.0004427343
    %v792 = vsel %vm791, %v789, %v786
    %v793 = vadd.f32 %v737, %v765
    %v794 = vadd.f32 %v738, %v774
    %v795 = vadd.f32 %v739, %v783
    %v796 = vadd.f32 %v740, %v792
    %797 = vst [vmem:[#allocation11] sm:$0xff] %v793
    %798 = vst [vmem:[#allocation11 + $0x8] sm:$0xff] %v794
    %799 = vst [vmem:[#allocation11 + $0x10] sm:$0xff] %v795
    %800 = vst [vmem:[#allocation11 + $0x18] sm:$0xff] %v796
    %v801 = vld [vmem:[#allocation3] sm:$0xff]
    %v802 = vld [vmem:[#allocation3 + $0x8] sm:$0xff]
    %v803 = vpack.c.bf16 %v793, %v793
    %v804 = vpack.c.bf16 %v794, %v794
    %v805 = vpack.c.bf16 %v795, %v795
    %v806 = vpack.c.bf16 %v796, %v796
    %v807 = vld [vmem:[#allocation9] sm:$0xff]
    %v808 = vld [vmem:[#allocation9 + $0x8] sm:$0xff]
    %v809 = vld [vmem:[#allocation9 + $0x10] sm:$0xff]
    %v810 = vld [vmem:[#allocation9 + $0x18] sm:$0xff]
    %v811 = vld [vmem:[#allocation9 + $0x20] sm:$0xff]
    %v812 = vld [vmem:[#allocation9 + $0x28] sm:$0xff]
    %v813 = vld [vmem:[#allocation9 + $0x30] sm:$0xff]
    %v814 = vld [vmem:[#allocation9 + $0x38] sm:$0xff]
    %v815 = vld [vmem:[#allocation9 + $0x40] sm:$0xff]
    %v816 = vld [vmem:[#allocation9 + $0x48] sm:$0xff]
    %v817 = vld [vmem:[#allocation9 + $0x50] sm:$0xff]
    %v818 = vld [vmem:[#allocation9 + $0x58] sm:$0xff]
    %v819 = vld [vmem:[#allocation9 + $0x60] sm:$0xff]
    %v820 = vld [vmem:[#allocation9 + $0x68] sm:$0xff]
    %v821 = vld [vmem:[#allocation9 + $0x70] sm:$0xff]
    %v822 = vld [vmem:[#allocation9 + $0x78] sm:$0xff]
    %v823 = vld [vmem:[#allocation9 + $0x80] sm:$0xff]
    %v824 = vld [vmem:[#allocation9 + $0x88] sm:$0xff]
    %v825 = vld [vmem:[#allocation9 + $0x90] sm:$0xff]
    %v826 = vld [vmem:[#allocation9 + $0x98] sm:$0xff]
    %v827 = vld [vmem:[#allocation9 + $0xa0] sm:$0xff]
    %v828 = vld [vmem:[#allocation9 + $0xa8] sm:$0xff]
    %v829 = vld [vmem:[#allocation9 + $0xb0] sm:$0xff]
    %v830 = vld [vmem:[#allocation9 + $0xb8] sm:$0xff]
    %v831 = vld [vmem:[#allocation9 + $0xc0] sm:$0xff]
    %v832 = vld [vmem:[#allocation9 + $0xc8] sm:$0xff]
    %v833 = vld [vmem:[#allocation9 + $0xd0] sm:$0xff]
    %v834 = vld [vmem:[#allocation9 + $0xd8] sm:$0xff]
    %v835 = vld [vmem:[#allocation9 + $0xe0] sm:$0xff]
    %v836 = vld [vmem:[#allocation9 + $0xe8] sm:$0xff]
    %v837 = vld [vmem:[#allocation9 + $0xf0] sm:$0xff]
    %v838 = vld [vmem:[#allocation9 + $0xf8] sm:$0xff]
    %v839 = vld [vmem:[#allocation9 + $0x100] sm:$0xff]
    %v840 = vld [vmem:[#allocation9 + $0x108] sm:$0xff]
    %v841 = vld [vmem:[#allocation9 + $0x110] sm:$0xff]
    %v842 = vld [vmem:[#allocation9 + $0x118] sm:$0xff]
    %v843 = vld [vmem:[#allocation9 + $0x120] sm:$0xff]
    %v844 = vld [vmem:[#allocation9 + $0x128] sm:$0xff]
    %v845 = vld [vmem:[#allocation9 + $0x130] sm:$0xff]
    %v846 = vld [vmem:[#allocation9 + $0x138] sm:$0xff]
    %v847 = vld [vmem:[#allocation9 + $0x140] sm:$0xff]
    %v848 = vld [vmem:[#allocation9 + $0x148] sm:$0xff]
    %v849 = vld [vmem:[#allocation9 + $0x150] sm:$0xff]
    %v850 = vld [vmem:[#allocation9 + $0x158] sm:$0xff]
    %v851 = vld [vmem:[#allocation9 + $0x160] sm:$0xff]
    %v852 = vld [vmem:[#allocation9 + $0x168] sm:$0xff]
    %v853 = vld [vmem:[#allocation9 + $0x170] sm:$0xff]
    %v854 = vld [vmem:[#allocation9 + $0x178] sm:$0xff]
    %v855 = vld [vmem:[#allocation9 + $0x180] sm:$0xff]
    %v856 = vld [vmem:[#allocation9 + $0x188] sm:$0xff]
    %v857 = vld [vmem:[#allocation9 + $0x190] sm:$0xff]
    %v858 = vld [vmem:[#allocation9 + $0x198] sm:$0xff]
    %v859 = vld [vmem:[#allocation9 + $0x1a0] sm:$0xff]
    %v860 = vld [vmem:[#allocation9 + $0x1a8] sm:$0xff]
    %v861 = vld [vmem:[#allocation9 + $0x1b0] sm:$0xff]
    %v862 = vld [vmem:[#allocation9 + $0x1b8] sm:$0xff]
    %v863 = vld [vmem:[#allocation9 + $0x1c0] sm:$0xff]
    %v864 = vld [vmem:[#allocation9 + $0x1c8] sm:$0xff]
    %v865 = vld [vmem:[#allocation9 + $0x1d0] sm:$0xff]
    %v866 = vld [vmem:[#allocation9 + $0x1d8] sm:$0xff]
    %v867 = vld [vmem:[#allocation9 + $0x1e0] sm:$0xff]
    %v868 = vld [vmem:[#allocation9 + $0x1e8] sm:$0xff]
    %v869 = vld [vmem:[#allocation9 + $0x1f0] sm:$0xff]
    %v870 = vld [vmem:[#allocation9 + $0x1f8] sm:$0xff]
    %v935 = vunpack.c.l.b16 %v807
    %v936 = vunpack.c.h.b16 %v807
    %v937 = vunpack.c.l.b16 %v808
    %v938 = vunpack.c.h.b16 %v808
    %v939 = vunpack.c.l.b16 %v809
    %v940 = vunpack.c.h.b16 %v809
    %v941 = vunpack.c.l.b16 %v810
    %v942 = vunpack.c.h.b16 %v810
    %v943 = vunpack.c.l.b16 %v811
    %v944 = vunpack.c.h.b16 %v811
    %v945 = vunpack.c.l.b16 %v812
    %v946 = vunpack.c.h.b16 %v812
    %v947 = vunpack.c.l.b16 %v813
    %v948 = vunpack.c.h.b16 %v813
    %v949 = vunpack.c.l.b16 %v814
    %v950 = vunpack.c.h.b16 %v814
    %v951 = vunpack.c.l.b16 %v815
    %v952 = vunpack.c.h.b16 %v815
    %v953 = vunpack.c.l.b16 %v816
    %v954 = vunpack.c.h.b16 %v816
    %v955 = vunpack.c.l.b16 %v817
    %v956 = vunpack.c.h.b16 %v817
    %v957 = vunpack.c.l.b16 %v818
    %v958 = vunpack.c.h.b16 %v818
    %v959 = vunpack.c.l.b16 %v819
    %v960 = vunpack.c.h.b16 %v819
    %v961 = vunpack.c.l.b16 %v820
    %v962 = vunpack.c.h.b16 %v820
    %v963 = vunpack.c.l.b16 %v821
    %v964 = vunpack.c.h.b16 %v821
    %v965 = vunpack.c.l.b16 %v822
    %v966 = vunpack.c.h.b16 %v822
    %v967 = vunpack.c.l.b16 %v823
    %v968 = vunpack.c.h.b16 %v823
    %v969 = vunpack.c.l.b16 %v824
    %v970 = vunpack.c.h.b16 %v824
    %v971 = vunpack.c.l.b16 %v825
    %v972 = vunpack.c.h.b16 %v825
    %v973 = vunpack.c.l.b16 %v826
    %v974 = vunpack.c.h.b16 %v826
    %v975 = vunpack.c.l.b16 %v827
    %v976 = vunpack.c.h.b16 %v827
    %v977 = vunpack.c.l.b16 %v828
    %v978 = vunpack.c.h.b16 %v828
    %v979 = vunpack.c.l.b16 %v829
    %v980 = vunpack.c.h.b16 %v829
    %v981 = vunpack.c.l.b16 %v830
    %v982 = vunpack.c.h.b16 %v830
    %v983 = vunpack.c.l.b16 %v831
    %v984 = vunpack.c.h.b16 %v831
    %v985 = vunpack.c.l.b16 %v832
    %v986 = vunpack.c.h.b16 %v832
    %v987 = vunpack.c.l.b16 %v833
    %v988 = vunpack.c.h.b16 %v833
    %v989 = vunpack.c.l.b16 %v834
    %v990 = vunpack.c.h.b16 %v834
    %v991 = vunpack.c.l.b16 %v835
    %v992 = vunpack.c.h.b16 %v835
    %v993 = vunpack.c.l.b16 %v836
    %v994 = vunpack.c.h.b16 %v836
    %v995 = vunpack.c.l.b16 %v837
    %v996 = vunpack.c.h.b16 %v837
    %v997 = vunpack.c.l.b16 %v838
    %v998 = vunpack.c.h.b16 %v838
    %v999 = vunpack.c.l.b16 %v839
    %v1000 = vunpack.c.h.b16 %v839
    %v1001 = vunpack.c.l.b16 %v840
    %v1002 = vunpack.c.h.b16 %v840
    %v1003 = vunpack.c.l.b16 %v841
    %v1004 = vunpack.c.h.b16 %v841
    %v1005 = vunpack.c.l.b16 %v842
    %v1006 = vunpack.c.h.b16 %v842
    %v1007 = vunpack.c.l.b16 %v843
    %v1008 = vunpack.c.h.b16 %v843
    %v1009 = vunpack.c.l.b16 %v844
    %v1010 = vunpack.c.h.b16 %v844
    %v1011 = vunpack.c.l.b16 %v845
    %v1012 = vunpack.c.h.b16 %v845
    %v1013 = vunpack.c.l.b16 %v846
    %v1014 = vunpack.c.h.b16 %v846
    %v1015 = vunpack.c.l.b16 %v847
    %v1016 = vunpack.c.h.b16 %v847
    %v1017 = vunpack.c.l.b16 %v848
    %v1018 = vunpack.c.h.b16 %v848
    %v1019 = vunpack.c.l.b16 %v849
    %v1020 = vunpack.c.h.b16 %v849
    %v1021 = vunpack.c.l.b16 %v850
    %v1022 = vunpack.c.h.b16 %v850
    %v1023 = vunpack.c.l.b16 %v851
    %v1024 = vunpack.c.h.b16 %v851
    %v1025 = vunpack.c.l.b16 %v852
    %v1026 = vunpack.c.h.b16 %v852
    %v1027 = vunpack.c.l.b16 %v853
    %v1028 = vunpack.c.h.b16 %v853
    %v1029 = vunpack.c.l.b16 %v854
    %v1030 = vunpack.c.h.b16 %v854
    %v1031 = vunpack.c.l.b16 %v855
    %v1032 = vunpack.c.h.b16 %v855
    %v1033 = vunpack.c.l.b16 %v856
    %v1034 = vunpack.c.h.b16 %v856
    %v1035 = vunpack.c.l.b16 %v857
    %v1036 = vunpack.c.h.b16 %v857
    %v1037 = vunpack.c.l.b16 %v858
    %v1038 = vunpack.c.h.b16 %v858
    %v1039 = vunpack.c.l.b16 %v859
    %v1040 = vunpack.c.h.b16 %v859
    %v1041 = vunpack.c.l.b16 %v860
    %v1042 = vunpack.c.h.b16 %v860
    %v1043 = vunpack.c.l.b16 %v861
    %v1044 = vunpack.c.h.b16 %v861
    %v1045 = vunpack.c.l.b16 %v862
    %v1046 = vunpack.c.h.b16 %v862
    %v1047 = vunpack.c.l.b16 %v863
    %v1048 = vunpack.c.h.b16 %v863
    %v1049 = vunpack.c.l.b16 %v864
    %v1050 = vunpack.c.h.b16 %v864
    %v1051 = vunpack.c.l.b16 %v865
    %v1052 = vunpack.c.h.b16 %v865
    %v1053 = vunpack.c.l.b16 %v866
    %v1054 = vunpack.c.h.b16 %v866
    %v1055 = vunpack.c.l.b16 %v867
    %v1056 = vunpack.c.h.b16 %v867
    %v1057 = vunpack.c.l.b16 %v868
    %v1058 = vunpack.c.h.b16 %v868
    %v1059 = vunpack.c.l.b16 %v869
    %v1060 = vunpack.c.h.b16 %v869
    %v1061 = vunpack.c.l.b16 %v870
    %v1062 = vunpack.c.h.b16 %v870
    %v1063 = vpack.c.b16 %v939, %v935
    %v1064 = vpack.c.b16 %v940, %v936
    %v1065 = vpack.c.b16 %v941, %v937
    %v1066 = vpack.c.b16 %v942, %v938
    %v1067 = vpack.c.b16 %v947, %v943
    %v1068 = vpack.c.b16 %v948, %v944
    %v1069 = vpack.c.b16 %v949, %v945
    %v1070 = vpack.c.b16 %v950, %v946
    %v1071 = vpack.c.b16 %v955, %v951
    %v1072 = vpack.c.b16 %v956, %v952
    %v1073 = vpack.c.b16 %v957, %v953
    %v1074 = vpack.c.b16 %v958, %v954
    %v1075 = vpack.c.b16 %v963, %v959
    %v1076 = vpack.c.b16 %v964, %v960
    %v1077 = vpack.c.b16 %v965, %v961
    %v1078 = vpack.c.b16 %v966, %v962
    %v1079 = vpack.c.b16 %v971, %v967
    %v1080 = vpack.c.b16 %v972, %v968
    %v1081 = vpack.c.b16 %v973, %v969
    %v1082 = vpack.c.b16 %v974, %v970
    %v1083 = vpack.c.b16 %v979, %v975
    %v1084 = vpack.c.b16 %v980, %v976
    %v1085 = vpack.c.b16 %v981, %v977
    %v1086 = vpack.c.b16 %v982, %v978
    %v1087 = vpack.c.b16 %v987, %v983
    %v1088 = vpack.c.b16 %v988, %v984
    %v1089 = vpack.c.b16 %v989, %v985
    %v1090 = vpack.c.b16 %v990, %v986
    %v1091 = vpack.c.b16 %v995, %v991
    %v1092 = vpack.c.b16 %v996, %v992
    %v1093 = vpack.c.b16 %v997, %v993
    %v1094 = vpack.c.b16 %v998, %v994
    %v1095 = vpack.c.b16 %v1003, %v999
    %v1096 = vpack.c.b16 %v1004, %v1000
    %v1097 = vpack.c.b16 %v1005, %v1001
    %v1098 = vpack.c.b16 %v1006, %v1002
    %v1099 = vpack.c.b16 %v1011, %v1007
    %v1100 = vpack.c.b16 %v1012, %v1008
    %v1101 = vpack.c.b16 %v1013, %v1009
    %v1102 = vpack.c.b16 %v1014, %v1010
    %v1103 = vpack.c.b16 %v1019, %v1015
    %v1104 = vpack.c.b16 %v1020, %v1016
    %v1105 = vpack.c.b16 %v1021, %v1017
    %v1106 = vpack.c.b16 %v1022, %v1018
    %v1107 = vpack.c.b16 %v1027, %v1023
    %v1108 = vpack.c.b16 %v1028, %v1024
    %v1109 = vpack.c.b16 %v1029, %v1025
    %v1110 = vpack.c.b16 %v1030, %v1026
    %v1111 = vpack.c.b16 %v1035, %v1031
    %v1112 = vpack.c.b16 %v1036, %v1032
    %v1113 = vpack.c.b16 %v1037, %v1033
    %v1114 = vpack.c.b16 %v1038, %v1034
    %v1115 = vpack.c.b16 %v1043, %v1039
    %v1116 = vpack.c.b16 %v1044, %v1040
    %v1117 = vpack.c.b16 %v1045, %v1041
    %v1118 = vpack.c.b16 %v1046, %v1042
    %v1119 = vpack.c.b16 %v1051, %v1047
    %v1120 = vpack.c.b16 %v1052, %v1048
    %v1121 = vpack.c.b16 %v1053, %v1049
    %v1122 = vpack.c.b16 %v1054, %v1050
    %v1123 = vpack.c.b16 %v1059, %v1055
    %v1124 = vpack.c.b16 %v1060, %v1056
    %v1125 = vpack.c.b16 %v1061, %v1057
    %v1126 = vpack.c.b16 %v1062, %v1058
    %1191 = vmatprep.subr.bf16.mxu0 %v1064
    %1192 = vmatpush1.bf16.xpose.msra.mxu0 %v1063
    %1193 = vmatprep.subr.bf16.mxu0 %v1068
    %1194 = vmatpush1.bf16.xpose.msra.mxu0 %v1067
    %1195 = vmatprep.subr.bf16.mxu0 %v1072
    %1196 = vmatpush1.bf16.xpose.msra.mxu0 %v1071
    %1197 = vmatprep.subr.bf16.mxu0 %v1076
    %1198 = vmatpush1.bf16.xpose.msra.mxu0 %v1075
    %1199 = vmatprep.subr.bf16.mxu0 %v1080
    %1200 = vmatpush1.bf16.xpose.msra.mxu0 %v1079
    %1201 = vmatprep.subr.bf16.mxu0 %v1084
    %1202 = vmatpush1.bf16.xpose.msra.mxu0 %v1083
    %1203 = vmatprep.subr.bf16.mxu0 %v1088
    %1204 = vmatpush1.bf16.xpose.msra.mxu0 %v1087
    %1205 = vmatprep.subr.bf16.mxu0 %v1092
    %1206 = vmatpush1.bf16.xpose.msra.mxu0 %v1091
    %1207 = vmatprep.subr.bf16.mxu0 %v1096
    %1208 = vmatpush1.bf16.xpose.msra.mxu0 %v1095
    %1209 = vmatprep.subr.bf16.mxu0 %v1100
    %1210 = vmatpush1.bf16.xpose.msra.mxu0 %v1099
    %1211 = vmatprep.subr.bf16.mxu0 %v1104
    %1212 = vmatpush1.bf16.xpose.msra.mxu0 %v1103
    %1213 = vmatprep.subr.bf16.mxu0 %v1108
    %1214 = vmatpush1.bf16.xpose.msra.mxu0 %v1107
    %1215 = vmatprep.subr.bf16.mxu0 %v1112
    %1216 = vmatpush1.bf16.xpose.msra.mxu0 %v1111
    %1217 = vmatprep.subr.bf16.mxu0 %v1116
    %1218 = vmatpush1.bf16.xpose.msra.mxu0 %v1115
    %1219 = vmatprep.subr.bf16.mxu0 %v1120
    %1220 = vmatpush1.bf16.xpose.msra.mxu0 %v1119
    %1221 = vmatprep.subr.bf16.mxu0 %v1124
    %1222 = vmatpush1.bf16.xpose.msra.mxu0 %v1123
    %1223 = vmatprep.mubr.bf16.mxu0 %v804
    %1224 = vmatmul.mubr.bf16.gmra.mrb[0].mxu0 %v803
    %v1225 = vpop.f32.mrb[0].mxu0
    %v1226 = vadd.f32 0.0, %v1225
    %v1227 = vpop.f32.mrb[0].mxu0
    %v1228 = vadd.f32 0.0, %v1227
    %v1229 = vpop.f32.mrb[0].mxu0
    %v1230 = vpop.f32.mrb[0].mxu0
    %1231 = vdwg.mxu0
    %1232 = vmatprep.subr.bf16.mxu0 %v1066
    %1233 = vmatpush1.bf16.xpose.msra.mxu0 %v1065
    %1234 = vmatprep.subr.bf16.mxu0 %v1070
    %1235 = vmatpush1.bf16.xpose.msra.mxu0 %v1069
    %1236 = vmatprep.subr.bf16.mxu0 %v1074
    %1237 = vmatpush1.bf16.xpose.msra.mxu0 %v1073
    %1238 = vmatprep.subr.bf16.mxu0 %v1078
    %1239 = vmatpush1.bf16.xpose.msra.mxu0 %v1077
    %1240 = vmatprep.subr.bf16.mxu0 %v1082
    %1241 = vmatpush1.bf16.xpose.msra.mxu0 %v1081
    %1242 = vmatprep.subr.bf16.mxu0 %v1086
    %1243 = vmatpush1.bf16.xpose.msra.mxu0 %v1085
    %1244 = vmatprep.subr.bf16.mxu0 %v1090
    %1245 = vmatpush1.bf16.xpose.msra.mxu0 %v1089
    %1246 = vmatprep.subr.bf16.mxu0 %v1094
    %1247 = vmatpush1.bf16.xpose.msra.mxu0 %v1093
    %1248 = vmatprep.subr.bf16.mxu0 %v1098
    %1249 = vmatpush1.bf16.xpose.msra.mxu0 %v1097
    %1250 = vmatprep.subr.bf16.mxu0 %v1102
    %1251 = vmatpush1.bf16.xpose.msra.mxu0 %v1101
    %1252 = vmatprep.subr.bf16.mxu0 %v1106
    %1253 = vmatpush1.bf16.xpose.msra.mxu0 %v1105
    %1254 = vmatprep.subr.bf16.mxu0 %v1110
    %1255 = vmatpush1.bf16.xpose.msra.mxu0 %v1109
    %1256 = vmatprep.subr.bf16.mxu0 %v1114
    %1257 = vmatpush1.bf16.xpose.msra.mxu0 %v1113
    %1258 = vmatprep.subr.bf16.mxu0 %v1118
    %1259 = vmatpush1.bf16.xpose.msra.mxu0 %v1117
    %1260 = vmatprep.subr.bf16.mxu0 %v1122
    %1261 = vmatpush1.bf16.xpose.msra.mxu0 %v1121
    %1262 = vmatprep.subr.bf16.mxu0 %v1126
    %1263 = vmatpush1.bf16.xpose.msra.mxu0 %v1125
    %1264 = vmatprep.mubr.bf16.mxu0 %v806
    %1265 = vmatmul.mubr.bf16.gmra.mrb[0].mxu0 %v805
    %v1266 = vpop.f32.mrb[0].mxu0
    %v1267 = vadd.f32 %v1226, %v1266
    %v1268 = vpop.f32.mrb[0].mxu0
    %v1269 = vadd.f32 %v1228, %v1268
    %v1270 = vpop.f32.mrb[0].mxu0
    %v1271 = vpop.f32.mrb[0].mxu0
    %1272 = vdwg.mxu0
    %v1273 = vadd.f32 %v801, %v1267
    %v1274 = vadd.f32 %v802, %v1269
    %1275 = vst [vmem:[#allocation3] sm:$0xff] %v1273
    %1276 = vst [vmem:[#allocation3 + $0x8] sm:$0xff] %v1274
    // Predicated region
    $region42: #{tpu_custom_call.1} parent=1 // pred_check
      %p1277 = pneg %p68
    $region43: #{tpu_custom_call.1} parent=1 // pred_check_branch
      %1279 = sbr.rel (%p1277) target = $region45
    $region44: #{tpu_custom_call.1} parent=1 // pred_region
      %v1280 = vld [vmem:[#allocation3] sm:$0xff]
      %v1281 = vld [vmem:[#allocation3 + $0x8] sm:$0xff]
      %v1282 = vld [vmem:[%s5] sm:$0x3]
      %v1284 = vlaneseq
      %v1285 = vshrl.u32 %v1284, 7
      %v1286 = vsub.s32 0, %v1285
      %v1287 = vrot.slane %v1282, %v1286
      %v1288 = vlaneseq
      %v1289 = vshrl.u32 %v1288, 7
      %v1290 = vsub.s32 1, %v1289
      %v1291 = vrot.slane %v1282, %v1290
      %v1294 = vadd.f32 %v1280, %v1287
      %v1295 = vadd.f32 %v1281, %v1291
      %1296 = vst [vmem:[#allocation10] sm:$0xff] %v1294
      %1297 = vst [vmem:[#allocation10 + $0x8] sm:$0xff] %v1295
    $region45: #{tpu_custom_call.1} parent=1 // pred_fallthru
      _
    // Predicated region
    $region46: #{tpu_custom_call.1} parent=1 // pred_check
      _
    $region47: #{tpu_custom_call.1} parent=1 // pred_check_branch
      %1299 = sbr.rel (0) target = $region49
    $region48: #{tpu_custom_call.1} parent=1 // pred_region
      %s1301 = ssub.s32 256, 256
      %1302 = vsyncadd [#allocation6], %s1301
      %s1304 = sshll.u32 [#allocation10], 4
      %s1305 = int_to_ptr.vmem [resolvable:$true] %s1304
      %1307 = dma.vmem_to_hbm [thread:$0]  %s1305, 256, %s6, [#allocation6]
    $region49: #{tpu_custom_call.1} parent=1 // pred_fallthru
      _
    // Predicated region
    $region50: #{tpu_custom_call.1} parent=1 // pred_check
      _
    $region51: #{tpu_custom_call.1} parent=1 // pred_check_branch
      %1309 = sbr.rel (0) target = $region53
    $region52: #{tpu_custom_call.1} parent=1 // pred_region
      %s1311 = ssub.s32 512, 512
      %1312 = vsyncadd [#allocation12], %s1311
      %s1314 = sshll.u32 [#allocation11], 4
      %s1315 = int_to_ptr.vmem [resolvable:$true] %s1314
      %1317 = dma.vmem_to_hbm [thread:$0]  %s1315, 512, %s7, [#allocation12]
    $region53: #{tpu_custom_call.1} parent=1 // pred_fallthru
      _
    // Predicated region
    $region54: #{tpu_custom_call.1} parent=1 // pred_check
      _
    $region55: #{tpu_custom_call.1} parent=1 // pred_check_branch
      %1319 = sbr.rel (0) target = $region57
    $region56: #{tpu_custom_call.1} parent=1 // pred_region
      %s1321 = ssub.s32 256, 256
      %1322 = vsyncadd [#allocation12], %s1321
      %s1324 = sshll.u32 [#allocation13], 4
      %s1325 = int_to_ptr.vmem [resolvable:$true] %s1324
      %1327 = dma.vmem_to_hbm [thread:$0]  %s1325, 256, %s8, [#allocation12]
    $region57: #{tpu_custom_call.1} parent=1 // pred_fallthru
      _
    // Predicated region
    $region58: #{tpu_custom_call.1} parent=1 // pred_check
      _
    $region59: #{tpu_custom_call.1} parent=1 // pred_check_branch
      %1329 = sbr.rel (0) target = $region61
    $region60: #{tpu_custom_call.1} parent=1 // pred_region
      %1330 = dma.done [#allocation6], 256
    $region61: #{tpu_custom_call.1} parent=1 // pred_fallthru
      _
    // Predicated region
    $region62: #{tpu_custom_call.1} parent=1 // pred_check
      _
    $region63: #{tpu_custom_call.1} parent=1 // pred_check_branch
      %1332 = sbr.rel (0) target = $region65
    $region64: #{tpu_custom_call.1} parent=1 // pred_region
      %1333 = dma.done [#allocation12], 512
    $region65: #{tpu_custom_call.1} parent=1 // pred_fallthru
      _
    // Predicated region
    $region66: #{tpu_custom_call.1} parent=1 // pred_check
      _
    $region67: #{tpu_custom_call.1} parent=1 // pred_check_branch
      %1335 = sbr.rel (0) target = $region69
    $region68: #{tpu_custom_call.1} parent=1 // pred_region
      %1336 = dma.done [#allocation12], 256
    $region69: #{tpu_custom_call.1} parent=1 // pred_fallthru
      _
    %1337 = vsyncpa [#allocation5], 1
    %1338 = vsyncpa [#allocation8], 1
    %1339 = vsyncpa [#allocation6], 1
    %1340 = vsyncpa [#allocation12], 1

</llo_original>
